<compile_context>
chip_gen: v7x
topology: tpu7x:2x2x1
jax: 0.10.0
libtpu: 0.0.40
codegen_flags: <defaults>
</compile_context>

<pallas_src>
import functools

import numpy as np
import jax
import jax.numpy as jnp
from jax import lax
from jax.experimental import pallas as pl
from jax.experimental.pallas import tpu as pltpu


# --------------------------------------------------------------------------
# Pallas kernels (hot path)
# --------------------------------------------------------------------------
def _score_kernel(x_ref, wnt_ref, s_ref):
    """S[p, l] = <x_patch[p], scale * wn[l]> — (M,K)x(K,N) MXU matmul, bf16 out."""
    s_ref[0] = jnp.dot(x_ref[0], wnt_ref[0],
                       preferred_element_type=jnp.float32).astype(s_ref.dtype)


def _attend_kernel(s_ref, mm_ref, rw_ref, o_ref, attn_ref):
    """Masked softmax over L (once per P tile), then out = attn @ raw_w slab.

    Grid = (batch, P tile, CK2 slab).  The attention weights are computed only
    on the first CK2 step and kept in a VMEM scratch; subsequent steps just run
    the (TP, L) x (L, TN) MXU matmul against the streamed raw-patch slab.
    Scores arrive pre-scaled by softmax_scale (folded into wnt in the wrapper).
    """
    @pl.when(pl.program_id(2) == 0)
    def _():
        s = s_ref[0].astype(jnp.float32)          # (TP, L)
        mm = mm_ref[...]                          # (1, L)  0/1 validity mask
        z = s * mm
        z = z - jnp.max(z, axis=-1, keepdims=True)
        e = jnp.exp(z)
        a = e * pl.reciprocal(jnp.sum(e, axis=-1, keepdims=True), approx=True)
        attn_ref[...] = (a * mm).astype(attn_ref.dtype)

    o_ref[0] = jnp.dot(attn_ref[...], rw_ref[0],
                       preferred_element_type=jnp.float32).astype(o_ref.dtype)


# --------------------------------------------------------------------------
# Feature detection / hardware-derived tiling helpers
# --------------------------------------------------------------------------
_BUFFERED1_OK = None


def _probe_copy_kernel(x_ref, o_ref):
    o_ref[...] = x_ref[...]


def _buffered1_supported():
    """Feature-detect BlockSpec(pipeline_mode=pl.Buffered(1)) on this jax/TPU."""
    global _BUFFERED1_OK
    if _BUFFERED1_OK is not None:
        return _BUFFERED1_OK
    try:
        spec = pl.BlockSpec((8, 128), lambda i: (0, 0),
                            pipeline_mode=pl.Buffered(1))
        fn = pl.pallas_call(
            _probe_copy_kernel,
            out_shape=jax.ShapeDtypeStruct((8, 128), jnp.float32),
            grid=(1,),
            in_specs=[spec],
            out_specs=pl.BlockSpec((8, 128), lambda i: (0, 0)))
        jax.jit(fn).lower(
            jax.ShapeDtypeStruct((8, 128), jnp.float32)).compile()
        _BUFFERED1_OK = True
    except Exception:
        _BUFFERED1_OK = False
    return _BUFFERED1_OK


def _resident_spec(shape, index_map):
    """Single-buffer blocks whose index is independent of the inner grid axes.

    Pallas double-buffers every input by default; for resident blocks (wnt,
    mm, un-tiled rw) that is dead VMEM — matters most on v7x (64 MiB VMEM).
    """
    if _buffered1_supported():
        return pl.BlockSpec(shape, index_map, pipeline_mode=pl.Buffered(1))
    return pl.BlockSpec(shape, index_map)


def _vmem_capacity_bytes():
    try:
        return int(pltpu.get_tpu_info().vmem_capacity_bytes)
    except Exception:
        return 64 * 1024 * 1024       # conservative (v7x-sized) default


# --------------------------------------------------------------------------
# JAX glue (exact ports of the reference helpers)
# --------------------------------------------------------------------------
def downsample_nn_tf(x, n):
    """NN downsampling matching TF align_corners=True semantics."""
    if n == 1:
        return x
    H, W = x.shape[2], x.shape[3]
    hi = jnp.floor(jnp.linspace(0.0, H - 1.0, H // n) + 0.5).astype(jnp.int32)
    wi = jnp.floor(jnp.linspace(0.0, W - 1.0, W // n) + 0.5).astype(jnp.int32)
    return x[:, :, hi, :][:, :, :, wi]


def _same_pad_amounts(H, W, ksizes, strides, rates):
    out_h = -(H // -strides[0])
    out_w = -(W // -strides[1])
    fh = (ksizes[0] - 1) * rates[0] + 1
    fw = (ksizes[1] - 1) * rates[1] + 1
    pad_h = max((out_h - 1) * strides[0] + fh - H, 0)
    pad_w = max((out_w - 1) * strides[1] + fw - W, 0)
    return pad_h // 2, pad_h - pad_h // 2, pad_w // 2, pad_w - pad_w // 2


def extract_patches_same(x, ksize, stride):
    """torch.nn.Unfold with TF 'SAME' padding; returns (B, C, k, k, L)."""
    B, C, H, W = x.shape
    pt, pb, pl_, pr = _same_pad_amounts(H, W, [ksize, ksize],
                                        [stride, stride], [1, 1])
    xp = jnp.pad(x, ((0, 0), (0, 0), (pt, pb), (pl_, pr)))
    out_h = (H + pt + pb - ksize) // stride + 1
    out_w = (W + pl_ + pr - ksize) // stride + 1
    rows = []
    for kh in range(ksize):
        cols = []
        for kw in range(ksize):
            sl = xp[:, :,
                    kh:kh + (out_h - 1) * stride + 1:stride,
                    kw:kw + (out_w - 1) * stride + 1:stride]
            cols.append(sl)
        rows.append(jnp.stack(cols, axis=2))         # (B, C, kw, oh, ow)
    patches = jnp.stack(rows, axis=2)                # (B, C, kh, kw, oh, ow)
    return patches.reshape(B, C, ksize, ksize, out_h * out_w), out_h, out_w


def _fuse_scores_t(St, Hf, Wf, Hb, Wb):
    """Two 3x3-identity-conv 'fuse' passes of the reference, in (P, L) layout.

    diag3 commutes with transpose, so running the reference pipeline with the
    (Hf,Wf) / (Hb,Wb) roles swapped on S^T yields exactly (fused S)^T.
    """
    def diag3(M):
        Mp = jnp.pad(M, ((1, 1), (1, 1)))
        return Mp[:-2, :-2] + Mp[1:-1, 1:-1] + Mp[2:, 2:]
    S1 = diag3(St)                                                   # (P, L)
    T = S1.reshape(Hf, Wf, Hb, Wb).transpose(1, 0, 3, 2).reshape(Wf * Hf, Wb * Hb)
    T2 = diag3(T)
    return T2.reshape(Wf, Hf, Wb, Hb).transpose(1, 0, 3, 2).reshape(Hf * Wf, Hb * Wb)


def _fold(cols, C, Hd, Wd, K, stride, pad):
    """col2im for conv_transpose2d(stride, padding=pad) with kernel K (f32 acc)."""
    cols = cols.astype(jnp.float32).reshape(Hd, Wd, C, K, K)
    Hfull = (Hd - 1) * stride + K
    Wfull = (Wd - 1) * stride + K
    full = jnp.zeros((C, Hfull, Wfull), jnp.float32)
    for kh in range(K):
        for kw in range(K):
            contrib = jnp.transpose(cols[:, :, :, kh, kw], (2, 0, 1))  # (C,Hd,Wd)
            full = full.at[:,
                           kh:kh + (Hd - 1) * stride + 1:stride,
                           kw:kw + (Wd - 1) * stride + 1:stride].add(contrib)
    return full[:, pad:Hfull - pad, pad:Wfull - pad]


# --------------------------------------------------------------------------
# Forward pass
# --------------------------------------------------------------------------
def contextual_attention(f, b, mask=None, *, ksize=3, stride=1, rate=2,
                         fuse_k=3, softmax_scale=10.0, n_down=2, fuse=True,
                         use_pallas=True):
    assert fuse_k == 3, "fuse kernel fixed to 3 (identity), as in the reference"
    B, C, Hf, Wf = f.shape
    kernel = 2 * rate

    # raw (full resolution) background patches used for reconstruction
    raw_p, rHo, rWo = extract_patches_same(b, kernel, rate * stride)
    L_raw = rHo * rWo
    raw_w_flat = raw_p.transpose(0, 4, 1, 2, 3).reshape(B, L_raw, C * kernel * kernel)

    # downsample both features for matching
    fd = downsample_nn_tf(f, rate)
    bd = downsample_nn_tf(b, rate)
    _, _, Hfd, Wfd = fd.shape
    _, _, Hbd, Wbd = bd.shape
    P = Hfd * Wfd
    L = Hbd * Wbd
    assert L == L_raw

    # background matching patches (3x3) and foreground pixel neighborhoods
    wp, _, _ = extract_patches_same(bd, ksize, stride)
    w_flat = wp.transpose(0, 4, 1, 2, 3).reshape(B, L, C * ksize * ksize)
    xp, _, _ = extract_patches_same(fd, ksize, 1)
    x_flat = xp.transpose(0, 4, 1, 2, 3).reshape(B, P, C * ksize * ksize)

    # mask -> per-patch validity mm (shared across batch, from element 0)
    if mask is None:
        mask = jnp.zeros((B, 1, Hbd, Wbd), f.dtype)
    else:
        mask = downsample_nn_tf(mask, (2 ** n_down) * rate)
    mp, _, _ = extract_patches_same(mask, ksize, stride)     # (Bm,1,k,k,L)
    mm = (jnp.mean(mp[0], axis=(0, 1, 2)) == 0.0).astype(jnp.float32)
    mm = mm.reshape(1, L)

    CK = C * ksize * ksize
    CK2 = C * kernel * kernel

    # --- precision / layout prep (inside the caller's jit; XLA fuses it) ----
    # normalize background patches in f32 (sum-of-squares + clamp as in the
    # reference), fold in softmax_scale, and transpose to (B, CK, L) so the
    # score matmul is (P,CK)x(CK,L) with L lane-dense; MXU inputs are bf16.
    w32 = w_flat.astype(jnp.float32)
    norm = jnp.sqrt(jnp.sum(w32 * w32, axis=2, keepdims=True))
    wn = w32 * (softmax_scale / jnp.maximum(norm, 1e-4))     # clamp_min(0.0001)
    wnt_bf = jnp.swapaxes(wn, 1, 2).astype(jnp.bfloat16)     # (B, CK, L)
    x_bf = x_flat.astype(jnp.bfloat16)                       # (B, P, CK)
    raw_bf = raw_w_flat.astype(jnp.bfloat16)                 # (B, L, CK2)

    # --- hardware-derived tiling --------------------------------------------
    vmem_cap = _vmem_capacity_bytes()
    big_vmem = vmem_cap >= 100 * 1024 * 1024        # v5e / v6e: 128 MiB VMEM
    tp_cap = 1024 if big_vmem else 512              # v7x: stay conservative
    vmem_limit = (96 if big_vmem else 44) * 1024 * 1024

    TP = min(P, tp_cap)
    NP = pl.cdiv(P, TP)
    # keep >=2 grid steps so both v7x TensorCores get work at tiny batch sizes
    if B * NP < 2 and P >= 16 and P % 16 == 0:
        TP = P // 2
        NP = 2

    # stream rw in (L, TN) slabs only when it would not fit residently (v7x)
    TN = CK2
    if CK2 % 256 == 0 and CK2 > 256:
        rw_budget = (32 if big_vmem else 8) * 1024 * 1024
        if L * CK2 * 2 > rw_budget:
            TN = 512 if CK2 % 512 == 0 else 256
    NC2 = CK2 // TN

    score_params = pltpu.CompilerParams(
        dimension_semantics=("parallel", "parallel"),
        vmem_limit_bytes=vmem_limit)
    attend_params = pltpu.CompilerParams(
        dimension_semantics=("parallel", "parallel", "arbitrary"),
        vmem_limit_bytes=vmem_limit)

    # --- scores: S = x @ (scale * wn)^T ------------------------------------
    if use_pallas:
        S = pl.pallas_call(
            _score_kernel,
            out_shape=jax.ShapeDtypeStruct((B, P, L), jnp.bfloat16),
            grid=(B, NP),
            in_specs=[pl.BlockSpec((1, TP, CK), lambda i, p: (i, p, 0)),
                      _resident_spec((1, CK, L), lambda i, p: (i, 0, 0))],
            out_specs=pl.BlockSpec((1, TP, L), lambda i, p: (i, p, 0)),
            compiler_params=score_params,
        )(x_bf, wnt_bf)
    else:
        S = jnp.einsum('bpk,bkl->bpl', x_bf, wnt_bf,
                       preferred_element_type=jnp.float32).astype(jnp.bfloat16)

    if fuse:
        # TODO(synk): moving the two diag3 'fuse' passes in-kernel needs the
        # full P axis per batch (cross-P-tile halos at strides 1 and Wf); kept
        # in JAX — the bf16 S halves this HBM round trip vs. the f32 version.
        S = jax.vmap(lambda s: _fuse_scores_t(s, Hfd, Wfd, Hbd, Wbd))(S)

    # --- attend: masked softmax over L, then attn @ raw patches -------------
    if use_pallas:
        rw_spec = (_resident_spec((1, L, TN), lambda i, p, j: (i, 0, j))
                   if NC2 == 1 else
                   pl.BlockSpec((1, L, TN), lambda i, p, j: (i, 0, j)))
        out_cols = pl.pallas_call(
            _attend_kernel,
            out_shape=jax.ShapeDtypeStruct((B, P, CK2), jnp.bfloat16),
            grid=(B, NP, NC2),
            in_specs=[pl.BlockSpec((1, TP, L), lambda i, p, j: (i, p, 0)),
                      _resident_spec((1, L), lambda i, p, j: (0, 0)),
                      rw_spec],
            out_specs=pl.BlockSpec((1, TP, TN), lambda i, p, j: (i, p, j)),
            scratch_shapes=[pltpu.VMEM((TP, L), jnp.bfloat16)],
            compiler_params=attend_params,
        )(S, mm, raw_bf)
    else:
        z = S.astype(jnp.float32) * mm[None]
        z = z - jnp.max(z, axis=-1, keepdims=True)
        e = jnp.exp(z)
        attn = e / jnp.sum(e, axis=-1, keepdims=True)
        attn = attn * mm[None]
        out_cols = jnp.einsum(
            'bpl,blk->bpk', attn.astype(jnp.bfloat16), raw_bf,
            preferred_element_type=jnp.float32).astype(jnp.bfloat16)

    # conv_transpose2d(stride=rate, padding=1) / 4.0  ==  fold + scale
    y = jax.vmap(lambda c: _fold(c, C, Hfd, Wfd, kernel, rate, 1))(out_cols) / 4.0
    y = y.reshape(f.shape).astype(f.dtype)
    # TODO(synk): return_flow path (argmax offsets + numpy flow_to_image color
    # wheel) is host-side visualization code with no Pallas equivalent.
    return y, None


# --------------------------------------------------------------------------
if __name__ == "__main__":
    key = jax.random.PRNGKey(0)
    kf, kb = jax.random.split(key)
    B, C, H, W = 2, 4, 16, 16
    f = jax.random.normal(kf, (B, C, H, W), jnp.float32)
    b = jax.random.normal(kb, (B, C, H, W), jnp.float32)

    fwd = jax.jit(functools.partial(contextual_attention, rate=2, use_pallas=True))
    y, _ = fwd(f, b)
    y = jax.block_until_ready(y)

    # pure-JAX reference of the same forward pass (same bf16/f32 precision
    # choices as the kernels) for a correctness check
    y_ref, _ = contextual_attention(f, b, rate=2, use_pallas=False)
    y_ref = jax.block_until_ready(y_ref)

    err = float(jnp.max(jnp.abs(y - y_ref)))
    # tolerance covers the approx (EUP) reciprocal and the bf16 S/out rounding
    if not np.isfinite(err) or err > 2e-2:
        raise RuntimeError(f"Pallas result mismatch vs reference, max abs err = {err}")
    assert y.shape == (B, C, H, W)
    print("KERNEL_OK")
</pallas_src>

<mosaic_0001>
module attributes {stable_mosaic.version = 11 : i64} {
  func.func @_score_kernel(%arg0: i32, %arg1: i32, %arg2: memref<1x64x36xbf16, #tpu.memory_space<vmem>>, %arg3: memref<1x36x64xbf16, #tpu.memory_space<vmem>>, %arg4: memref<1x64x64xbf16, #tpu.memory_space<vmem>>) attributes {dimension_semantics = [#tpu.dimension_semantics<parallel>, #tpu.dimension_semantics<parallel>], iteration_bounds = array<i64: 2, 1>, scalar_prefetch = 0 : i64, scratch_operands = 0 : i64, tpu.core_type = #tpu.core_type<tc>, window_params = [{transform_indices = @transform_0, window_bounds = array<i64: 1, 64, 36>}, {transform_indices = @transform_1, window_bounds = array<i64: 1, 36, 64>}, {transform_indices = @transform_2, window_bounds = array<i64: 1, 64, 64>}]} {
    %c0 = arith.constant 0 : index
    %c0_0 = arith.constant 0 : index
    %c0_1 = arith.constant 0 : index
    %0 = vector.load %arg2[%c0, %c0_0, %c0_1] : memref<1x64x36xbf16, #tpu.memory_space<vmem>>, vector<1x64x36xbf16>
    %1 = vector.shape_cast %0 : vector<1x64x36xbf16> to vector<64x36xbf16>
    %c0_2 = arith.constant 0 : index
    %c0_3 = arith.constant 0 : index
    %c0_4 = arith.constant 0 : index
    %2 = vector.load %arg3[%c0_2, %c0_3, %c0_4] : memref<1x36x64xbf16, #tpu.memory_space<vmem>>, vector<1x36x64xbf16>
    %3 = vector.shape_cast %2 : vector<1x36x64xbf16> to vector<36x64xbf16>
    %cst = arith.constant dense<0.000000e+00> : vector<64x64xf32>
    %4 = tpu.matmul %1, %3, %cst {dimension_numbers = #tpu.dot_dimension_numbers<[1], [0], [0], [1], [0, 0, 1, 1], [], []>} : vector<64x36xbf16>, vector<36x64xbf16>, vector<64x64xf32> -> vector<64x64xf32>
    %5 = arith.truncf %4 : vector<64x64xf32> to vector<64x64xbf16>
    %c0_5 = arith.constant 0 : index
    %c0_6 = arith.constant 0 : index
    %c0_7 = arith.constant 0 : index
    %6 = vector.load %arg4[%c0_5, %c0_6, %c0_7] : memref<1x64x64xbf16, #tpu.memory_space<vmem>>, vector<1x64x64xbf16>
    %7 = vector.shape_cast %6 : vector<1x64x64xbf16> to vector<64x64xbf16>
    %8 = vector.shape_cast %5 : vector<64x64xbf16> to vector<1x64x64xbf16>
    tpu.vector_store %arg4[%c0_5, %c0_6, %c0_7], %8 {strides = array<i32>} : memref<1x64x64xbf16, #tpu.memory_space<vmem>>, vector<1x64x64xbf16>,
    return
  }
  func.func @transform_0(%arg0: i32, %arg1: i32) -> (i32, i32, i32) {
    %c0_i32 = arith.constant 0 : i32
    %c0_i32_0 = arith.constant 0 : i32
    return %arg0, %arg1, %c0_i32 : i32, i32, i32
  }
  func.func @transform_1(%arg0: i32, %arg1: i32) -> (i32, i32, i32) {
    %c0_i32 = arith.constant 0 : i32
    %c0_i32_0 = arith.constant 0 : i32
    %c0_i32_1 = arith.constant 0 : i32
    return %arg0, %c0_i32, %c0_i32_0 : i32, i32, i32
  }
  func.func @transform_2(%arg0: i32, %arg1: i32) -> (i32, i32, i32) {
    %c0_i32 = arith.constant 0 : i32
    %c0_i32_0 = arith.constant 0 : i32
    return %arg0, %arg1, %c0_i32 : i32, i32, i32
  }
}

module attributes {stable_mosaic.version = 11 : i64} {
  func.func @_attend_kernel(%arg0: i32, %arg1: i32, %arg2: i32, %arg3: memref<1x64x64xbf16, #tpu.memory_space<vmem>>, %arg4: memref<1x64xf32, #tpu.memory_space<vmem>>, %arg5: memref<1x64x64xbf16, #tpu.memory_space<vmem>>, %arg6: memref<1x64x64xbf16, #tpu.memory_space<vmem>>, %arg7: memref<64x64xbf16, #tpu.memory_space<vmem>>) attributes {dimension_semantics = [#tpu.dimension_semantics<parallel>, #tpu.dimension_semantics<parallel>, #tpu.dimension_semantics<arbitrary>], iteration_bounds = array<i64: 2, 1, 1>, scalar_prefetch = 0 : i64, scratch_operands = 1 : i64, tpu.core_type = #tpu.core_type<tc>, window_params = [{transform_indices = @transform_0, window_bounds = array<i64: 1, 64, 64>}, {pipeline_mode = #tpu.pipeline_mode<synchronous>, transform_indices = @transform_1, window_bounds = array<i64: 1, 64>}, {transform_indices = @transform_2, window_bounds = array<i64: 1, 64, 64>}, {transform_indices = @transform_3, window_bounds = array<i64: 1, 64, 64>}]} {
    %c0_i32 = arith.constant 0 : i32
    %0 = arith.cmpi eq, %arg2, %c0_i32 : i32
    %1 = arith.extui %0 : i1 to i32
    %c0_i32_0 = arith.constant 0 : i32
    %2 = arith.cmpi ne, %1, %c0_i32_0 : i32
    scf.if %2 {
      %c0_8 = arith.constant 0 : index
      %c0_9 = arith.constant 0 : index
      %c0_10 = arith.constant 0 : index
      %11 = vector.load %arg3[%c0_8, %c0_9, %c0_10] : memref<1x64x64xbf16, #tpu.memory_space<vmem>>, vector<1x64x64xbf16>
      %12 = vector.shape_cast %11 : vector<1x64x64xbf16> to vector<64x64xbf16>
      %13 = arith.extf %12 : vector<64x64xbf16> to vector<64x64xf32>
      %c0_11 = arith.constant 0 : index
      %c0_12 = arith.constant 0 : index
      %14 = vector.load %arg4[%c0_11, %c0_12] : memref<1x64xf32, #tpu.memory_space<vmem>>, vector<1x64xf32>
      %15 = vector.broadcast %14 : vector<1x64xf32> to vector<64x64xf32>
      %16 = arith.mulf %13, %15 : vector<64x64xf32>
      %cst_13 = arith.constant dense<0xFF800000> : vector<64xf32>
      %17 = vector.multi_reduction <maximumf>, %16, %cst_13 [1] : vector<64x64xf32> to vector<64xf32>
      %18 = vector.shape_cast %17 : vector<64xf32> to vector<64x1xf32>
      %19 = vector.broadcast %18 : vector<64x1xf32> to vector<64x64xf32>
      %20 = arith.subf %16, %19 : vector<64x64xf32>
      %21 = math.exp %20 : vector<64x64xf32>
      %cst_14 = arith.constant dense<0.000000e+00> : vector<64xf32>
      %22 = vector.multi_reduction <add>, %21, %cst_14 [1] : vector<64x64xf32> to vector<64xf32>
      %23 = vector.shape_cast %22 : vector<64xf32> to vector<64x1xf32>
      %24 = tpu.reciprocal %23 {approx = true} : vector<64x1xf32> -> vector<64x1xf32>
      %25 = vector.broadcast %24 : vector<64x1xf32> to vector<64x64xf32>
      %26 = arith.mulf %21, %25 : vector<64x64xf32>
      %27 = vector.broadcast %14 : vector<1x64xf32> to vector<64x64xf32>
      %28 = arith.mulf %26, %27 : vector<64x64xf32>
      %29 = arith.truncf %28 : vector<64x64xf32> to vector<64x64xbf16>
      %c0_15 = arith.constant 0 : index
      %c0_16 = arith.constant 0 : index
      %30 = vector.load %arg7[%c0_15, %c0_16] : memref<64x64xbf16, #tpu.memory_space<vmem>>, vector<64x64xbf16>
      tpu.vector_store %arg7[%c0_15, %c0_16], %29 {strides = array<i32>} : memref<64x64xbf16, #tpu.memory_space<vmem>>, vector<64x64xbf16>,
    } else {
    }
    %c0 = arith.constant 0 : index
    %c0_1 = arith.constant 0 : index
    %3 = vector.load %arg7[%c0, %c0_1] : memref<64x64xbf16, #tpu.memory_space<vmem>>, vector<64x64xbf16>
    %c0_2 = arith.constant 0 : index
    %c0_3 = arith.constant 0 : index
    %c0_4 = arith.constant 0 : index
    %4 = vector.load %arg5[%c0_2, %c0_3, %c0_4] : memref<1x64x64xbf16, #tpu.memory_space<vmem>>, vector<1x64x64xbf16>
    %5 = vector.shape_cast %4 : vector<1x64x64xbf16> to vector<64x64xbf16>
    %cst = arith.constant dense<0.000000e+00> : vector<64x64xf32>
    %6 = tpu.matmul %3, %5, %cst {dimension_numbers = #tpu.dot_dimension_numbers<[1], [0], [0], [1], [0, 0, 1, 1], [], []>} : vector<64x64xbf16>, vector<64x64xbf16>, vector<64x64xf32> -> vector<64x64xf32>
    %7 = arith.truncf %6 : vector<64x64xf32> to vector<64x64xbf16>
    %c0_5 = arith.constant 0 : index
    %c0_6 = arith.constant 0 : index
    %c0_7 = arith.constant 0 : index
    %8 = vector.load %arg6[%c0_5, %c0_6, %c0_7] : memref<1x64x64xbf16, #tpu.memory_space<vmem>>, vector<1x64x64xbf16>
    %9 = vector.shape_cast %8 : vector<1x64x64xbf16> to vector<64x64xbf16>
    %10 = vector.shape_cast %7 : vector<64x64xbf16> to vector<1x64x64xbf16>
    tpu.vector_store %arg6[%c0_5, %c0_6, %c0_7], %10 {strides = array<i32>} : memref<1x64x64xbf16, #tpu.memory_space<vmem>>, vector<1x64x64xbf16>,
    return
  }
  func.func @transform_0(%arg0: i32, %arg1: i32, %arg2: i32) -> (i32, i32, i32) {
    %c0_i32 = arith.constant 0 : i32
    %c0_i32_0 = arith.constant 0 : i32
    return %arg0, %arg1, %c0_i32 : i32, i32, i32
  }
  func.func @transform_1(%arg0: i32, %arg1: i32, %arg2: i32) -> (i32, i32) {
    %c0_i32 = arith.constant 0 : i32
    %c0_i32_0 = arith.constant 0 : i32
    %c0_i32_1 = arith.constant 0 : i32
    return %c0_i32, %c0_i32_0 : i32, i32
  }
  func.func @transform_2(%arg0: i32, %arg1: i32, %arg2: i32) -> (i32, i32, i32) {
    %c0_i32 = arith.constant 0 : i32
    %c0_i32_0 = arith.constant 0 : i32
    return %arg0, %c0_i32, %arg2 : i32, i32, i32
  }
  func.func @transform_3(%arg0: i32, %arg1: i32, %arg2: i32) -> (i32, i32, i32) {
    %c0_i32 = arith.constant 0 : i32
    return %arg0, %arg1, %arg2 : i32, i32, i32
  }
}

</mosaic_0001>

<llo_original>
// kernel: contextual_attention.2
$region0: #{contextual_attention.2}
  #allocation0 [shape = 'u32[]', space=smem, size = 0x4, offset = 0x4, fixed_abs, tag = 'smem constant byte address 0x4 - core index']
  #allocation1 [shape = 'u32[144,128]{1,0:T(1,128)}', space=vmem, size = 0x12000, scoped, tag = 'internal scratch']
  %s0 = inlined_call_operand.vmem [shape: bf16[2,64,36], index: 0, kind: input, shape index: {}]
  %s1 = inlined_call_operand.vmem [shape: bf16[2,36,64], index: 1, kind: input, shape index: {}]
  %s2 = inlined_call_operand.vmem [shape: bf16[2,64,64], index: 2, kind: output, shape index: {}]
  %s3 = sld [smem:[#allocation0]]
  $region41: #{contextual_attention.2} parent=0
    _
  %s5 = ssub.s32 1, %s3
  %s6 = scalar_select 0, %s5, %s3
  loop: start=0, step=1, limit=4
  $region2: #{contextual_attention.2} parent=0 // loop_pre_header
    _
  $region3: #{contextual_attention.2} parent=0 // loop_header
    %s8 = sphi 0, %s12
    %p9 = scmp.ge.s32.totalorder %s8, 4
    %s15 = sphi 0, %s27
    %s16 = sphi 0, %s23
    %s17 = sphi 0, %s15
    %s18 = sphi 0, %s16
    %s19 = sphi 0, %s17
    %s20 = sphi 0, %s18
    %s32 = sphi 0, %s34
    %s35 = sphi 0, %s32
    %s36 = sphi 0, %s35
    %s52 = sphi 0, %s36
    %s58 = sphi 0, %s60
    %s61 = sphi 0, %s58
    %s62 = sphi 0, %s61
    %s78 = sphi 0, %s62
    %s86 = sphi 0, %s88
    %s89 = sphi 0, %s86
    %s90 = sphi 0, %s89
    %s106 = sphi 0, %s90
  $region4: #{contextual_attention.2} parent=0 // loop_header_branch
    %11 = sbr.rel (%p9) target = $region8
  $region5: #{contextual_attention.2} parent=0 // loop_body
    %s13 = ssub.s32 %s8, 1
    %s14 = ssub.s32 %s8, 2
    %s21 = sadd.s32 1, %s16
    %p22 = scmp.ge.s32.totalorder %s21, 1
    %s23 = scalar_select %p22, 0, %s21
    %s24 = sadd.s32 1, %s15
    %s25 = scalar_select %p22, %s24, %s15
    %p26 = scmp.ge.s32.totalorder %s25, 2
    %s27 = scalar_select %p26, 0, %s25
    %s28 = ssub.s32 %s15, %s27
    %s29 = ssub.s32 %s16, %s23
    %s30 = sor.u32 %s28, %s29
    %p31 = scmp.eq.s32.totalorder %s30, 0
    %s33 = sadd.s32 %s32, 1
    %s34 = scalar_select %p31, %s32, %s33
    %p37 = pneg %p31
    %p38 = scmp.eq.s32.totalorder %s8, 1
    %p39 = por %p37, %p38
    %p40 = scmp.ne.s32.totalorder %s32, %s35
    %p41 = scmp.eq.s32.totalorder %s8, 0
    %p42 = por %p40, %p41
    %p43 = scmp.ne.s32.totalorder %s32, %s35
    %p44 = scmp.eq.s32.totalorder %s13, 1
    %p45 = por %p43, %p44
    %p46 = scmp.ne.s32.totalorder %s35, %s36
    %p47 = scmp.eq.s32.totalorder %s13, 0
    %p48 = por %p46, %p47
    %p49 = scmp.ne.s32.totalorder %s35, %s36
    %p50 = scmp.eq.s32.totalorder %s14, 1
    %p51 = por %p49, %p50
    %p53 = scmp.ne.s32.totalorder %s36, %s52
    %p54 = scmp.eq.s32.totalorder %s14, 0
    %p55 = por %p53, %p54
    %s56 = ssub.s32 %s15, %s27
    %p57 = scmp.eq.s32.totalorder %s56, 0
    %s59 = sadd.s32 %s58, 1
    %s60 = scalar_select %p57, %s58, %s59
    %p63 = pneg %p57
    %p64 = scmp.eq.s32.totalorder %s8, 1
    %p65 = por %p63, %p64
    %p66 = scmp.ne.s32.totalorder %s58, %s61
    %p67 = scmp.eq.s32.totalorder %s8, 0
    %p68 = por %p66, %p67
    %p69 = scmp.ne.s32.totalorder %s58, %s61
    %p70 = scmp.eq.s32.totalorder %s13, 1
    %p71 = por %p69, %p70
    %p72 = scmp.ne.s32.totalorder %s61, %s62
    %p73 = scmp.eq.s32.totalorder %s13, 0
    %p74 = por %p72, %p73
    %p75 = scmp.ne.s32.totalorder %s61, %s62
    %p76 = scmp.eq.s32.totalorder %s14, 1
    %p77 = por %p75, %p76
    %p79 = scmp.ne.s32.totalorder %s62, %s78
    %p80 = scmp.eq.s32.totalorder %s14, 0
    %p81 = por %p79, %p80
    %s82 = ssub.s32 %s15, %s27
    %s83 = ssub.s32 %s16, %s23
    %s84 = sor.u32 %s82, %s83
    %p85 = scmp.eq.s32.totalorder %s84, 0
    %s87 = sadd.s32 %s86, 1
    %s88 = scalar_select %p85, %s86, %s87
    %p91 = pneg %p85
    %p92 = scmp.eq.s32.totalorder %s8, 1
    %p93 = por %p91, %p92
    %p94 = scmp.ne.s32.totalorder %s86, %s89
    %p95 = scmp.eq.s32.totalorder %s8, 0
    %p96 = por %p94, %p95
    %p97 = scmp.ne.s32.totalorder %s86, %s89
    %p98 = scmp.eq.s32.totalorder %s13, 1
    %p99 = por %p97, %p98
    %p100 = scmp.ne.s32.totalorder %s89, %s90
    %p101 = scmp.eq.s32.totalorder %s13, 0
    %p102 = por %p100, %p101
    %p103 = scmp.ne.s32.totalorder %s89, %s90
    %p104 = scmp.eq.s32.totalorder %s14, 1
    %p105 = por %p103, %p104
    %p107 = scmp.ne.s32.totalorder %s90, %s106
    %p108 = scmp.eq.s32.totalorder %s14, 0
    %p109 = por %p107, %p108
    %p110 = scmp.le.s32.totalorder 1, %s8
    %p111 = scmp.lt.s32.totalorder %s8, 3
    %p112 = pnand %p110, %p111
    %p113 = pneg %p112
    // Predicated region
    $region9: #{contextual_attention.2} parent=5 // pred_check
      _
    $region10: #{contextual_attention.2} parent=5 // pred_check_branch
      %115 = sbr.rel (%p112) target = $region12
    $region11: #{contextual_attention.2} parent=5 // pred_region
      %s116 = ssub.s32 %s8, 1
    $region12: #{contextual_attention.2} parent=5 // pred_fallthru
      _
    %p117 = scmp.lt.s32.totalorder %s8, 2
    // Predicated region
    $region13: #{contextual_attention.2} parent=5 // pred_check
      %p118 = pneg %p117
    $region14: #{contextual_attention.2} parent=5 // pred_check_branch
      %120 = sbr.rel (%p118) target = $region16
    $region15: #{contextual_attention.2} parent=5 // pred_region
      // Predicated region
      $region17: #{contextual_attention.2} parent=15 // pred_check
        %p121 = pneg %p42
      $region18: #{contextual_attention.2} parent=15 // pred_check_branch
        %123 = sbr.rel (%p121) target = $region20
      $region19: #{contextual_attention.2} parent=15 // pred_region
        %s124 = smul.u32 8, %s16
        %p125 = scmp.lt.s32.totalorder %s15, 1
        %s126 = scalar_select %p125, %s15, 1
        %p127 = scmp.lt.s32.totalorder %s124, 7
        %s128 = scalar_select %p127, %s124, 7
        %s129 = smul.addr %s126, 8
        %s130 = sadd.s32 %s128, %s129
        %s131 = smul.addr %s130, 4
        %s132 = scalar_lea.vmem %s0, %s131
        %s133 = smul.u32 8, %s16
      $region20: #{contextual_attention.2} parent=15 // pred_fallthru
        _
      // Predicated region
      $region21: #{contextual_attention.2} parent=15 // pred_check
        %p134 = pneg %p68
      $region22: #{contextual_attention.2} parent=15 // pred_check_branch
        %136 = sbr.rel (%p134) target = $region24
      $region23: #{contextual_attention.2} parent=15 // pred_region
        %p137 = scmp.lt.s32.totalorder %s15, 1
        %s138 = scalar_select %p137, %s15, 1
        %s139 = smul.addr %s138, 5
        %s140 = smul.addr %s139, 4
        %s141 = scalar_lea.vmem %s1, %s140
      $region24: #{contextual_attention.2} parent=15 // pred_fallthru
        _
    $region16: #{contextual_attention.2} parent=5 // pred_fallthru
      _
    %p142 = scmp.le.s32.totalorder 1, %s8
    %p143 = scmp.lt.s32.totalorder %s8, 3
    %p144 = pnand %p142, %p143
    %p145 = pneg %p144
    // Predicated region
    $region25: #{contextual_attention.2} parent=5 // pred_check
      _
    $region26: #{contextual_attention.2} parent=5 // pred_check_branch
      %147 = sbr.rel (%p144) target = $region28
    $region27: #{contextual_attention.2} parent=5 // pred_region
      %s148 = ssub.s32 %s8, 1
      %s149 = smul.u32 8, %s18
      %p150 = scmp.lt.s32.totalorder %s17, 1
      %s151 = scalar_select %p150, %s17, 1
      %p152 = scmp.lt.s32.totalorder %s149, 7
      %s153 = scalar_select %p152, %s149, 7
      %s154 = smul.addr %s151, 8
      %s155 = sadd.s32 %s153, %s154
      %s156 = smul.addr %s155, 4
      %s157 = scalar_lea.vmem %s0, %s156
      %p158 = pneg %p48
      %p159 = pneg %p45
      %p160 = scmp.lt.s32.totalorder %s17, 1
      %s161 = scalar_select %p160, %s17, 1
      %s162 = smul.addr %s161, 5
      %s163 = smul.addr %s162, 4
      %s164 = scalar_lea.vmem %s1, %s163
      %p165 = pneg %p74
      %p166 = pneg %p71
      %p167 = pneg %p102
      %p168 = pneg %p99
      %s169 = smul.u32 8, %s18
      %p170 = scmp.lt.s32.totalorder %s17, 1
      %s171 = scalar_select %p170, %s17, 1
      %p172 = scmp.lt.s32.totalorder %s169, 7
      %s173 = scalar_select %p172, %s169, 7
      %s174 = smul.addr %s171, 8
      %s175 = sadd.s32 %s173, %s174
      %s176 = smul.addr %s175, 4
      %s177 = scalar_lea.vmem %s2, %s176
      %s178 = smul.u32 8, %s18
      %p179 = scmp.lt.s32.totalorder %s17, 1
      %s180 = scalar_select %p179, %s17, 1
      %p181 = scmp.lt.s32.totalorder %s178, 7
      %s182 = scalar_select %p181, %s178, 7
      %s183 = smul.addr %s180, 8
      %s184 = sadd.s32 %s182, %s183
      %s185 = smul.addr %s184, 4
      %s186 = scalar_lea.vmem %s0, %s185
      %s187 = smul.u32 8, %s18
      %p188 = scmp.lt.s32.totalorder %s17, 1
      %s189 = scalar_select %p188, %s17, 1
      %s190 = smul.addr %s189, 5
      %s191 = smul.addr %s190, 4
      %s192 = scalar_lea.vmem %s1, %s191
      %s193 = smul.u32 8, %s18
      %p194 = scmp.lt.s32.totalorder %s17, 1
      %s195 = scalar_select %p194, %s17, 1
      %p196 = scmp.lt.s32.totalorder %s193, 7
      %s197 = scalar_select %p196, %s193, 7
      %s198 = smul.addr %s195, 8
      %s199 = sadd.s32 %s197, %s198
      %s200 = smul.addr %s199, 4
      %s201 = scalar_lea.vmem %s2, %s200
      %s202 = smul.u32 8, %s18
      %v204 = vld [vmem:[%s186] sm:$0xf]
      %v205 = vld [vmem:[%s186 + $0x4] sm:$0xf]
      %v206 = vld [vmem:[%s186 + $0x8] sm:$0xf]
      %v207 = vld [vmem:[%s186 + $0xc] sm:$0xf]
      %v208 = vld [vmem:[%s186 + $0x10] sm:$0xf]
      %v209 = vld [vmem:[%s186 + $0x14] sm:$0xf]
      %v210 = vld [vmem:[%s186 + $0x18] sm:$0xf]
      %v211 = vld [vmem:[%s186 + $0x1c] sm:$0xf]
      %v212 = vld [vmem:[%s192] sm:$0xf]
      %v213 = vld [vmem:[%s192 + $0x4] sm:$0xf]
      %v214 = vld [vmem:[%s192 + $0x8] sm:$0xf]
      %v215 = vld [vmem:[%s192 + $0xc] sm:$0xf]
      %v216 = vld [vmem:[%s192 + $0x10] sm:$0x3]
      %v225 = vunpack.c.l.b16 %v204
      %v226 = vunpack.c.l.b16 %v205
      %v227 = vunpack.c.l.b16 %v206
      %v228 = vunpack.c.l.b16 %v207
      %v229 = vunpack.c.l.b16 %v208
      %v230 = vunpack.c.l.b16 %v209
      %v231 = vunpack.c.l.b16 %v210
      %v232 = vunpack.c.l.b16 %v211
      %v233 = vpack.c.b16 %v226, %v225
      %v234 = vpack.c.b16 %v228, %v227
      %v235 = vpack.c.b16 %v230, %v229
      %v236 = vpack.c.b16 %v232, %v231
      %v242 = vunpack.c.l.b16 %v212
      %v243 = vunpack.c.l.b16 %v213
      %v244 = vunpack.c.l.b16 %v214
      %v245 = vunpack.c.l.b16 %v215
      %v246 = vunpack.c.l.b16 %v216
      %v247 = vpack.c.b16 %v243, %v242
      %v248 = vpack.c.b16 %v245, %v244
      %v249 = vpack.c.b16 %v246, %v246
      %vm252 = vcmask 293888
      %v254 = vsel %vm252, %v233, 0
      %v257 = vsel %vm252, %v234, 0
      %v260 = vsel %vm252, %v235, 0
      %v263 = vsel %vm252, %v236, 0
      %vm265 = vcmask 1041408
      %v267 = vsel %vm265, %v249, 0
      %269 = vmatprep.subr.bf16.mxu0 0
      %270 = vmatpush1.bf16.msra.mxu0 %v247
      %271 = vmatprep.subr.bf16.mxu0 0
      %272 = vmatpush1.bf16.msra.mxu0 %v248
      %273 = vmatprep.subr.bf16.mxu0 0
      %274 = vmatpush1.bf16.msra.mxu0 %v267
      %275 = vmatprep.subr.bf16.mxu0 0
      %276 = vmatpush1.bf16.msra.mxu0 0
      %277 = vmatprep.subr.bf16.mxu0 0
      %278 = vmatpush1.bf16.msra.mxu0 0
      %279 = vmatprep.subr.bf16.mxu0 0
      %280 = vmatpush1.bf16.msra.mxu0 0
      %281 = vmatprep.subr.bf16.mxu0 0
      %282 = vmatpush1.bf16.msra.mxu0 0
      %283 = vmatprep.subr.bf16.mxu0 0
      %284 = vmatpush1.bf16.msra.mxu0 0
      %285 = vmatprep.subr.bf16.mxu0 0
      %286 = vmatpush1.bf16.msra.mxu0 0
      %287 = vmatprep.subr.bf16.mxu0 0
      %288 = vmatpush1.bf16.msra.mxu0 0
      %289 = vmatprep.subr.bf16.mxu0 0
      %290 = vmatpush1.bf16.msra.mxu0 0
      %291 = vmatprep.subr.bf16.mxu0 0
      %292 = vmatpush1.bf16.msra.mxu0 0
      %293 = vmatprep.subr.bf16.mxu0 0
      %294 = vmatpush1.bf16.msra.mxu0 0
      %295 = vmatprep.subr.bf16.mxu0 0
      %296 = vmatpush1.bf16.msra.mxu0 0
      %297 = vmatprep.subr.bf16.mxu0 0
      %298 = vmatpush1.bf16.msra.mxu0 0
      %299 = vmatprep.subr.bf16.mxu0 0
      %300 = vmatpush1.bf16.msra.mxu0 0
      %301 = vmatprep.mubr.bf16.mxu0 0
      %302 = vmatmul.mubr.bf16.gmra.mrb[0].mxu0 %v254
      %v303 = vpop.f32.mrb[0].mxu0
      %v304 = vadd.f32 0.0, %v303
      %v305 = vpop.f32.mrb[0].mxu0
      %v306 = vpop.f32.mrb[0].mxu0
      %v307 = vadd.f32 0.0, %v306
      %v308 = vpop.f32.mrb[0].mxu0
      %309 = vmatprep.mubr.bf16.mxu0 0
      %310 = vmatmul.mubr.bf16.gmra.mrb[0].mxu0 %v257
      %v311 = vpop.f32.mrb[0].mxu0
      %v312 = vadd.f32 0.0, %v311
      %v313 = vpop.f32.mrb[0].mxu0
      %v314 = vpop.f32.mrb[0].mxu0
      %v315 = vadd.f32 0.0, %v314
      %v316 = vpop.f32.mrb[0].mxu0
      %317 = vmatprep.mubr.bf16.mxu0 0
      %318 = vmatmul.mubr.bf16.gmra.mrb[0].mxu0 %v260
      %v319 = vpop.f32.mrb[0].mxu0
      %v320 = vadd.f32 0.0, %v319
      %v321 = vpop.f32.mrb[0].mxu0
      %v322 = vpop.f32.mrb[0].mxu0
      %v323 = vadd.f32 0.0, %v322
      %v324 = vpop.f32.mrb[0].mxu0
      %325 = vmatprep.mubr.bf16.mxu0 0
      %326 = vmatmul.mubr.bf16.gmra.mrb[0].mxu0 %v263
      %v327 = vpop.f32.mrb[0].mxu0
      %v328 = vadd.f32 0.0, %v327
      %v329 = vpop.f32.mrb[0].mxu0
      %v330 = vpop.f32.mrb[0].mxu0
      %v331 = vadd.f32 0.0, %v330
      %v332 = vpop.f32.mrb[0].mxu0
      %333 = vdwg.mxu0
      %v334 = vpack.c.bf16 %v307, %v304
      %v335 = vpack.c.bf16 %v315, %v312
      %v336 = vpack.c.bf16 %v323, %v320
      %v337 = vpack.c.bf16 %v331, %v328
      %v342 = vunpack.c.l.b16 %v334
      %v343 = vunpack.c.h.b16 %v334
      %v344 = vunpack.c.l.b16 %v335
      %v345 = vunpack.c.h.b16 %v335
      %v346 = vunpack.c.l.b16 %v336
      %v347 = vunpack.c.h.b16 %v336
      %v348 = vunpack.c.l.b16 %v337
      %v349 = vunpack.c.h.b16 %v337
      %v350 = vpack.c.b16 %v342, %v342
      %v351 = vpack.c.b16 %v343, %v343
      %v352 = vpack.c.b16 %v344, %v344
      %v353 = vpack.c.b16 %v345, %v345
      %v354 = vpack.c.b16 %v346, %v346
      %v355 = vpack.c.b16 %v347, %v347
      %v356 = vpack.c.b16 %v348, %v348
      %v357 = vpack.c.b16 %v349, %v349
      %vm366 = vcmask 519168
      %367 = vst.msk [vmem:[%s201] sm:$0xf] %vm366, %v350
      %368 = vst.msk [vmem:[%s201 + $0x4] sm:$0xf] %vm366, %v351
      %369 = vst.msk [vmem:[%s201 + $0x8] sm:$0xf] %vm366, %v352
      %370 = vst.msk [vmem:[%s201 + $0xc] sm:$0xf] %vm366, %v353
      %371 = vst.msk [vmem:[%s201 + $0x10] sm:$0xf] %vm366, %v354
      %372 = vst.msk [vmem:[%s201 + $0x14] sm:$0xf] %vm366, %v355
      %373 = vst.msk [vmem:[%s201 + $0x18] sm:$0xf] %vm366, %v356
      %374 = vst.msk [vmem:[%s201 + $0x1c] sm:$0xf] %vm366, %v357
      %s375 = smul.u32 8, %s18
      %p376 = scmp.lt.s32.totalorder %s17, 1
      %s377 = scalar_select %p376, %s17, 1
      %p378 = scmp.lt.s32.totalorder %s375, 7
      %s379 = scalar_select %p378, %s375, 7
      %s380 = smul.addr %s377, 8
      %s381 = sadd.s32 %s379, %s380
      %s382 = smul.addr %s381, 4
      %s383 = scalar_lea.vmem %s2, %s382
      // Predicated region
      $region29: #{contextual_attention.2} parent=27 // pred_check
        %p384 = pneg %p99
      $region30: #{contextual_attention.2} parent=27 // pred_check_branch
        %386 = sbr.rel (%p384) target = $region32
      $region31: #{contextual_attention.2} parent=27 // pred_region
        %s387 = smul.u32 8, %s18
      $region32: #{contextual_attention.2} parent=27 // pred_fallthru
        _
    $region28: #{contextual_attention.2} parent=5 // pred_fallthru
      _
    %p388 = scmp.le.s32.totalorder 2, %s8
    // Predicated region
    $region33: #{contextual_attention.2} parent=5 // pred_check
      %p389 = pneg %p388
    $region34: #{contextual_attention.2} parent=5 // pred_check_branch
      %391 = sbr.rel (%p389) target = $region36
    $region35: #{contextual_attention.2} parent=5 // pred_region
      %s392 = ssub.s32 %s8, 2
      // Predicated region
      $region37: #{contextual_attention.2} parent=35 // pred_check
        %p393 = pneg %p105
      $region38: #{contextual_attention.2} parent=35 // pred_check_branch
        %395 = sbr.rel (%p393) target = $region40
      $region39: #{contextual_attention.2} parent=35 // pred_region
        %s396 = smul.u32 8, %s20
        %p397 = scmp.lt.s32.totalorder %s19, 1
        %s398 = scalar_select %p397, %s19, 1
        %p399 = scmp.lt.s32.totalorder %s396, 7
        %s400 = scalar_select %p399, %s396, 7
        %s401 = smul.addr %s398, 8
        %s402 = sadd.s32 %s400, %s401
        %s403 = smul.addr %s402, 4
        %s404 = scalar_lea.vmem %s2, %s403
      $region40: #{contextual_attention.2} parent=35 // pred_fallthru
        _
    $region36: #{contextual_attention.2} parent=5 // pred_fallthru
      _
  $region6: #{contextual_attention.2} parent=0 // loop_footer
    %s12 = sadd.s32 1, %s8
  $region7: #{contextual_attention.2} parent=0 // loop_footer_branch
    %7 = sbr.rel target = $region3
  $region8: #{contextual_attention.2} parent=0 // loop_exit
    _

// kernel: contextual_attention.3
$region0: #{contextual_attention.3}
  #allocation0 [shape = 'u32[]', space=smem, size = 0x4, offset = 0x4, fixed_abs, tag = 'smem constant byte address 0x4 - core index']
  #allocation1 [shape = 'u32[144,128]{1,0:T(1,128)}', space=vmem, size = 0x12000, scoped, tag = 'internal scratch']
  #allocation2 [shape = 'bf16[64,64]{1,0:T(16,128)(2,1)}', space=vmem, size = 0x4000, scoped, tag = 'scratch operand']
  %s0 = inlined_call_operand.vmem [shape: bf16[2,64,64], index: 0, kind: input, shape index: {}]
  %s1 = inlined_call_operand.vmem [shape: f32[1,64], index: 1, kind: input, shape index: {}]
  %s2 = inlined_call_operand.vmem [shape: bf16[2,64,64], index: 2, kind: input, shape index: {}]
  %s3 = inlined_call_operand.vmem [shape: bf16[2,64,64], index: 3, kind: output, shape index: {}]
  %s4 = sld [smem:[#allocation0]]
  $region49: #{contextual_attention.3} parent=0
    _
  %s6 = ssub.s32 1, %s4
  %s7 = scalar_select 0, %s6, %s4
  loop: start=0, step=1, limit=4
  $region2: #{contextual_attention.3} parent=0 // loop_pre_header
    _
  $region3: #{contextual_attention.3} parent=0 // loop_header
    %s9 = sphi 0, %s13
    %p10 = scmp.ge.s32.totalorder %s9, 4
    %s16 = sphi 0, %s35
    %s17 = sphi 0, %s31
    %s18 = sphi 0, %s27
    %s19 = sphi 0, %s16
    %s20 = sphi 0, %s17
    %s21 = sphi 0, %s18
    %s22 = sphi 0, %s19
    %s23 = sphi 0, %s20
    %s24 = sphi 0, %s21
    %s40 = sphi 0, %s42
    %s43 = sphi 0, %s40
    %s44 = sphi 0, %s43
    %s60 = sphi 0, %s44
    %s64 = sphi 0, %s64
    %s66 = sphi 0, %s64
    %s67 = sphi 0, %s66
    %s81 = sphi 0, %s67
    %s89 = sphi 0, %s91
    %s92 = sphi 0, %s89
    %s93 = sphi 0, %s92
    %s109 = sphi 0, %s93
    %s119 = sphi 0, %s121
    %s122 = sphi 0, %s119
    %s123 = sphi 0, %s122
    %s139 = sphi 0, %s123
  $region4: #{contextual_attention.3} parent=0 // loop_header_branch
    %12 = sbr.rel (%p10) target = $region8
  $region5: #{contextual_attention.3} parent=0 // loop_body
    %s14 = ssub.s32 %s9, 1
    %s15 = ssub.s32 %s9, 2
    %s25 = sadd.s32 1, %s18
    %p26 = scmp.ge.s32.totalorder %s25, 1
    %s27 = scalar_select %p26, 0, %s25
    %s28 = sadd.s32 1, %s17
    %s29 = scalar_select %p26, %s28, %s17
    %p30 = scmp.ge.s32.totalorder %s29, 1
    %s31 = scalar_select %p30, 0, %s29
    %s32 = sadd.s32 1, %s16
    %s33 = scalar_select %p30, %s32, %s16
    %p34 = scmp.ge.s32.totalorder %s33, 2
    %s35 = scalar_select %p34, 0, %s33
    %s36 = ssub.s32 %s16, %s35
    %s37 = ssub.s32 %s17, %s31
    %s38 = sor.u32 %s36, %s37
    %p39 = scmp.eq.s32.totalorder %s38, 0
    %s41 = sadd.s32 %s40, 1
    %s42 = scalar_select %p39, %s40, %s41
    %p45 = pneg %p39
    %p46 = scmp.eq.s32.totalorder %s9, 1
    %p47 = por %p45, %p46
    %p48 = scmp.ne.s32.totalorder %s40, %s43
    %p49 = scmp.eq.s32.totalorder %s9, 0
    %p50 = por %p48, %p49
    %p51 = scmp.ne.s32.totalorder %s40, %s43
    %p52 = scmp.eq.s32.totalorder %s14, 1
    %p53 = por %p51, %p52
    %p54 = scmp.ne.s32.totalorder %s43, %s44
    %p55 = scmp.eq.s32.totalorder %s14, 0
    %p56 = por %p54, %p55
    %p57 = scmp.ne.s32.totalorder %s43, %s44
    %p58 = scmp.eq.s32.totalorder %s15, 1
    %p59 = por %p57, %p58
    %p61 = scmp.ne.s32.totalorder %s44, %s60
    %p62 = scmp.eq.s32.totalorder %s15, 0
    %p63 = por %p61, %p62
    %s65 = sadd.s32 %s64, 1
    %p68 = scmp.eq.s32.totalorder %s9, 1
    %p69 = scmp.ne.s32.totalorder %s64, %s66
    %p70 = scmp.eq.s32.totalorder %s9, 0
    %p71 = por %p69, %p70
    %p72 = scmp.ne.s32.totalorder %s64, %s66
    %p73 = scmp.eq.s32.totalorder %s14, 1
    %p74 = por %p72, %p73
    %p75 = scmp.ne.s32.totalorder %s66, %s67
    %p76 = scmp.eq.s32.totalorder %s14, 0
    %p77 = por %p75, %p76
    %p78 = scmp.ne.s32.totalorder %s66, %s67
    %p79 = scmp.eq.s32.totalorder %s15, 1
    %p80 = por %p78, %p79
    %p82 = scmp.ne.s32.totalorder %s67, %s81
    %p83 = scmp.eq.s32.totalorder %s15, 0
    %p84 = por %p82, %p83
    %s85 = ssub.s32 %s16, %s35
    %s86 = ssub.s32 %s18, %s27
    %s87 = sor.u32 %s85, %s86
    %p88 = scmp.eq.s32.totalorder %s87, 0
    %s90 = sadd.s32 %s89, 1
    %s91 = scalar_select %p88, %s89, %s90
    %p94 = pneg %p88
    %p95 = scmp.eq.s32.totalorder %s9, 1
    %p96 = por %p94, %p95
    %p97 = scmp.ne.s32.totalorder %s89, %s92
    %p98 = scmp.eq.s32.totalorder %s9, 0
    %p99 = por %p97, %p98
    %p100 = scmp.ne.s32.totalorder %s89, %s92
    %p101 = scmp.eq.s32.totalorder %s14, 1
    %p102 = por %p100, %p101
    %p103 = scmp.ne.s32.totalorder %s92, %s93
    %p104 = scmp.eq.s32.totalorder %s14, 0
    %p105 = por %p103, %p104
    %p106 = scmp.ne.s32.totalorder %s92, %s93
    %p107 = scmp.eq.s32.totalorder %s15, 1
    %p108 = por %p106, %p107
    %p110 = scmp.ne.s32.totalorder %s93, %s109
    %p111 = scmp.eq.s32.totalorder %s15, 0
    %p112 = por %p110, %p111
    %s113 = ssub.s32 %s16, %s35
    %s114 = ssub.s32 %s17, %s31
    %s115 = sor.u32 %s113, %s114
    %s116 = ssub.s32 %s18, %s27
    %s117 = sor.u32 %s115, %s116
    %p118 = scmp.eq.s32.totalorder %s117, 0
    %s120 = sadd.s32 %s119, 1
    %s121 = scalar_select %p118, %s119, %s120
    %p124 = pneg %p118
    %p125 = scmp.eq.s32.totalorder %s9, 1
    %p126 = por %p124, %p125
    %p127 = scmp.ne.s32.totalorder %s119, %s122
    %p128 = scmp.eq.s32.totalorder %s9, 0
    %p129 = por %p127, %p128
    %p130 = scmp.ne.s32.totalorder %s119, %s122
    %p131 = scmp.eq.s32.totalorder %s14, 1
    %p132 = por %p130, %p131
    %p133 = scmp.ne.s32.totalorder %s122, %s123
    %p134 = scmp.eq.s32.totalorder %s14, 0
    %p135 = por %p133, %p134
    %p136 = scmp.ne.s32.totalorder %s122, %s123
    %p137 = scmp.eq.s32.totalorder %s15, 1
    %p138 = por %p136, %p137
    %p140 = scmp.ne.s32.totalorder %s123, %s139
    %p141 = scmp.eq.s32.totalorder %s15, 0
    %p142 = por %p140, %p141
    %p143 = scmp.le.s32.totalorder 1, %s9
    %p144 = scmp.lt.s32.totalorder %s9, 3
    %p145 = pnand %p143, %p144
    %p146 = pneg %p145
    // Predicated region
    $region9: #{contextual_attention.3} parent=5 // pred_check
      _
    $region10: #{contextual_attention.3} parent=5 // pred_check_branch
      %148 = sbr.rel (%p145) target = $region12
    $region11: #{contextual_attention.3} parent=5 // pred_region
      %s149 = ssub.s32 %s9, 1
      // Predicated region
      $region13: #{contextual_attention.3} parent=11 // pred_check
        %p150 = pneg %p77
      $region14: #{contextual_attention.3} parent=11 // pred_check_branch
        %152 = sbr.rel (%p150) target = $region16
      $region15: #{contextual_attention.3} parent=11 // pred_region
        _
      $region16: #{contextual_attention.3} parent=11 // pred_fallthru
        _
    $region12: #{contextual_attention.3} parent=5 // pred_fallthru
      _
    %p153 = scmp.lt.s32.totalorder %s9, 2
    // Predicated region
    $region17: #{contextual_attention.3} parent=5 // pred_check
      %p154 = pneg %p153
    $region18: #{contextual_attention.3} parent=5 // pred_check_branch
      %156 = sbr.rel (%p154) target = $region20
    $region19: #{contextual_attention.3} parent=5 // pred_region
      // Predicated region
      $region21: #{contextual_attention.3} parent=19 // pred_check
        %p157 = pneg %p50
      $region22: #{contextual_attention.3} parent=19 // pred_check_branch
        %159 = sbr.rel (%p157) target = $region24
      $region23: #{contextual_attention.3} parent=19 // pred_region
        %s160 = smul.u32 8, %s17
        %p161 = scmp.lt.s32.totalorder %s16, 1
        %s162 = scalar_select %p161, %s16, 1
        %p163 = scmp.lt.s32.totalorder %s160, 7
        %s164 = scalar_select %p163, %s160, 7
        %s165 = smul.addr %s162, 8
        %s166 = sadd.s32 %s164, %s165
        %s167 = smul.addr %s166, 4
        %s168 = scalar_lea.vmem %s0, %s167
        %s169 = smul.u32 8, %s17
      $region24: #{contextual_attention.3} parent=19 // pred_fallthru
        _
      // Predicated region
      $region25: #{contextual_attention.3} parent=19 // pred_check
        %p170 = pneg %p99
      $region26: #{contextual_attention.3} parent=19 // pred_check_branch
        %172 = sbr.rel (%p170) target = $region28
      $region27: #{contextual_attention.3} parent=19 // pred_region
        %p173 = scmp.lt.s32.totalorder %s16, 1
        %s174 = scalar_select %p173, %s16, 1
        %p175 = scmp.lt.s32.totalorder %s18, 0
        %s176 = scalar_select %p175, %s18, 0
        %s177 = smul.addr %s174, 8
        %s178 = sadd.s32 %s176, %s177
        %s179 = smul.addr %s178, 4
        %s180 = scalar_lea.vmem %s2, %s179
      $region28: #{contextual_attention.3} parent=19 // pred_fallthru
        _
    $region20: #{contextual_attention.3} parent=5 // pred_fallthru
      _
    %p181 = scmp.le.s32.totalorder 1, %s9
    %p182 = scmp.lt.s32.totalorder %s9, 3
    %p183 = pnand %p181, %p182
    %p184 = pneg %p183
    // Predicated region
    $region29: #{contextual_attention.3} parent=5 // pred_check
      _
    $region30: #{contextual_attention.3} parent=5 // pred_check_branch
      %186 = sbr.rel (%p183) target = $region32
    $region31: #{contextual_attention.3} parent=5 // pred_region
      %s187 = ssub.s32 %s9, 1
      %s188 = smul.u32 8, %s20
      %p189 = scmp.lt.s32.totalorder %s19, 1
      %s190 = scalar_select %p189, %s19, 1
      %p191 = scmp.lt.s32.totalorder %s188, 7
      %s192 = scalar_select %p191, %s188, 7
      %s193 = smul.addr %s190, 8
      %s194 = sadd.s32 %s192, %s193
      %s195 = smul.addr %s194, 4
      %s196 = scalar_lea.vmem %s0, %s195
      %p197 = pneg %p56
      %p198 = pneg %p53
      %p199 = pneg %p77
      %p200 = pneg %p74
      %p201 = scmp.lt.s32.totalorder %s19, 1
      %s202 = scalar_select %p201, %s19, 1
      %p203 = scmp.lt.s32.totalorder %s21, 0
      %s204 = scalar_select %p203, %s21, 0
      %s205 = smul.addr %s202, 8
      %s206 = sadd.s32 %s204, %s205
      %s207 = smul.addr %s206, 4
      %s208 = scalar_lea.vmem %s2, %s207
      %p209 = pneg %p105
      %p210 = pneg %p102
      %p211 = pneg %p135
      %p212 = pneg %p132
      %s213 = smul.u32 8, %s20
      %p214 = scmp.lt.s32.totalorder %s19, 1
      %s215 = scalar_select %p214, %s19, 1
      %p216 = scmp.lt.s32.totalorder %s213, 7
      %s217 = scalar_select %p216, %s213, 7
      %p218 = scmp.lt.s32.totalorder %s21, 0
      %s219 = scalar_select %p218, %s21, 0
      %s220 = sadd.s32 %s219, %s217
      %s221 = smul.addr %s215, 8
      %s222 = sadd.s32 %s220, %s221
      %s223 = smul.addr %s222, 4
      %s224 = scalar_lea.vmem %s3, %s223
      %s225 = smul.u32 8, %s20
      %p226 = scmp.lt.s32.totalorder %s19, 1
      %s227 = scalar_select %p226, %s19, 1
      %p228 = scmp.lt.s32.totalorder %s225, 7
      %s229 = scalar_select %p228, %s225, 7
      %s230 = smul.addr %s227, 8
      %s231 = sadd.s32 %s229, %s230
      %s232 = smul.addr %s231, 4
      %s233 = scalar_lea.vmem %s0, %s232
      %s234 = smul.u32 8, %s20
      %p235 = scmp.lt.s32.totalorder %s19, 1
      %s236 = scalar_select %p235, %s19, 1
      %p237 = scmp.lt.s32.totalorder %s21, 0
      %s238 = scalar_select %p237, %s21, 0
      %s239 = smul.addr %s236, 8
      %s240 = sadd.s32 %s238, %s239
      %s241 = smul.addr %s240, 4
      %s242 = scalar_lea.vmem %s2, %s241
      %s243 = smul.u32 8, %s20
      %p244 = scmp.lt.s32.totalorder %s19, 1
      %s245 = scalar_select %p244, %s19, 1
      %p246 = scmp.lt.s32.totalorder %s243, 7
      %s247 = scalar_select %p246, %s243, 7
      %p248 = scmp.lt.s32.totalorder %s21, 0
      %s249 = scalar_select %p248, %s21, 0
      %s250 = sadd.s32 %s249, %s247
      %s251 = smul.addr %s245, 8
      %s252 = sadd.s32 %s250, %s251
      %s253 = smul.addr %s252, 4
      %s254 = scalar_lea.vmem %s3, %s253
      %s255 = smul.u32 8, %s20
      %p257 = scmp.eq.s32.totalorder %s21, 0
      // Predicated region
      $region33: #{contextual_attention.3} parent=31 // pred_check
        %p258 = pneg %p257
      $region34: #{contextual_attention.3} parent=31 // pred_check_branch
        %260 = sbr.rel (%p258) target = $region36
      $region35: #{contextual_attention.3} parent=31 // pred_region
        %v261 = vld [vmem:[%s233] sm:$0xf]
        %v262 = vld [vmem:[%s233 + $0x4] sm:$0xf]
        %v263 = vld [vmem:[%s233 + $0x8] sm:$0xf]
        %v264 = vld [vmem:[%s233 + $0xc] sm:$0xf]
        %v265 = vld [vmem:[%s233 + $0x10] sm:$0xf]
        %v266 = vld [vmem:[%s233 + $0x14] sm:$0xf]
        %v267 = vld [vmem:[%s233 + $0x18] sm:$0xf]
        %v268 = vld [vmem:[%s233 + $0x1c] sm:$0xf]
        %v269 = vunpack.c.l.bf16 %v261
        %v270 = vunpack.c.l.bf16 %v262
        %v271 = vunpack.c.l.bf16 %v263
        %v272 = vunpack.c.l.bf16 %v264
        %v273 = vunpack.c.l.bf16 %v265
        %v274 = vunpack.c.l.bf16 %v266
        %v275 = vunpack.c.l.bf16 %v267
        %v276 = vunpack.c.l.bf16 %v268
        %v277 = vld [vmem:[%s1] sm:$0x1]
        %v279 = vlaneseq
        %v280 = vshrl.u32 %v279, 7
        %v281 = vsub.s32 0, %v280
        %v282 = vrot.slane %v277, %v281
        %v284 = vmul.f32 %v269, %v282
        %v285 = vmul.f32 %v270, %v282
        %v286 = vmul.f32 %v271, %v282
        %v287 = vmul.f32 %v272, %v282
        %v288 = vmul.f32 %v273, %v282
        %v289 = vmul.f32 %v274, %v282
        %v290 = vmul.f32 %v275, %v282
        %v291 = vmul.f32 %v276, %v282
        %vm292 = vcmask 523264
        %v293 = vsel %vm292, %v284, -inf
        %294 = vmax.xlane.f32.xlu0 %v293
        %v295 = vpop.xlane.xlu0 %294
        %v296 = vsel %vm292, %v285, -inf
        %297 = vmax.xlane.f32.xlu0 %v296
        %v298 = vpop.xlane.xlu0 %297
        %v299 = vsel %vm292, %v286, -inf
        %300 = vmax.xlane.f32.xlu0 %v299
        %v301 = vpop.xlane.xlu0 %300
        %v302 = vsel %vm292, %v287, -inf
        %303 = vmax.xlane.f32.xlu0 %v302
        %v304 = vpop.xlane.xlu0 %303
        %v305 = vsel %vm292, %v288, -inf
        %306 = vmax.xlane.f32.xlu0 %v305
        %v307 = vpop.xlane.xlu0 %306
        %v308 = vsel %vm292, %v289, -inf
        %309 = vmax.xlane.f32.xlu0 %v308
        %v310 = vpop.xlane.xlu0 %309
        %v311 = vsel %vm292, %v290, -inf
        %312 = vmax.xlane.f32.xlu0 %v311
        %v313 = vpop.xlane.xlu0 %312
        %v314 = vsel %vm292, %v291, -inf
        %315 = vmax.xlane.f32.xlu0 %v314
        %v316 = vpop.xlane.xlu0 %315
        %v317 = vsub.f32 %v284, %v295
        %v318 = vsub.f32 %v285, %v298
        %v319 = vsub.f32 %v286, %v301
        %v320 = vsub.f32 %v287, %v304
        %v321 = vsub.f32 %v288, %v307
        %v322 = vsub.f32 %v289, %v310
        %v323 = vsub.f32 %v290, %v313
        %v324 = vsub.f32 %v291, %v316
        %v325 = vmul.f32 %v317, 1.442695
        %v326 = vpow.pop %v325
        %v327 = vmul.f32 %v318, 1.442695
        %v328 = vpow.pop %v327
        %v329 = vmul.f32 %v319, 1.442695
        %v330 = vpow.pop %v329
        %v331 = vmul.f32 %v320, 1.442695
        %v332 = vpow.pop %v331
        %v333 = vmul.f32 %v321, 1.442695
        %v334 = vpow.pop %v333
        %v335 = vmul.f32 %v322, 1.442695
        %v336 = vpow.pop %v335
        %v337 = vmul.f32 %v323, 1.442695
        %v338 = vpow.pop %v337
        %v339 = vmul.f32 %v324, 1.442695
        %v340 = vpow.pop %v339
        %v341 = vsel %vm292, %v326, 0.0
        %342 = vadd.xlane.f32.xlu0 %v341
        %v343 = vpop.xlane.xlu0 %342
        %v344 = vsel %vm292, %v328, 0.0
        %345 = vadd.xlane.f32.xlu0 %v344
        %v346 = vpop.xlane.xlu0 %345
        %v347 = vsel %vm292, %v330, 0.0
        %348 = vadd.xlane.f32.xlu0 %v347
        %v349 = vpop.xlane.xlu0 %348
        %v350 = vsel %vm292, %v332, 0.0
        %351 = vadd.xlane.f32.xlu0 %v350
        %v352 = vpop.xlane.xlu0 %351
        %v353 = vsel %vm292, %v334, 0.0
        %354 = vadd.xlane.f32.xlu0 %v353
        %v355 = vpop.xlane.xlu0 %354
        %v356 = vsel %vm292, %v336, 0.0
        %357 = vadd.xlane.f32.xlu0 %v356
        %v358 = vpop.xlane.xlu0 %357
        %v359 = vsel %vm292, %v338, 0.0
        %360 = vadd.xlane.f32.xlu0 %v359
        %v361 = vpop.xlane.xlu0 %360
        %v362 = vsel %vm292, %v340, 0.0
        %363 = vadd.xlane.f32.xlu0 %v362
        %v364 = vpop.xlane.xlu0 %363
        %v365 = vrcp.pop %v343
        %v366 = vrcp.pop %v346
        %v367 = vrcp.pop %v349
        %v368 = vrcp.pop %v352
        %v369 = vrcp.pop %v355
        %v370 = vrcp.pop %v358
        %v371 = vrcp.pop %v361
        %v372 = vrcp.pop %v364
        %v373 = vmul.f32 %v326, %v365
        %v374 = vmul.f32 %v328, %v366
        %v375 = vmul.f32 %v330, %v367
        %v376 = vmul.f32 %v332, %v368
        %v377 = vmul.f32 %v334, %v369
        %v378 = vmul.f32 %v336, %v370
        %v379 = vmul.f32 %v338, %v371
        %v380 = vmul.f32 %v340, %v372
        %v381 = vmul.f32 %v373, %v282
        %v382 = vmul.f32 %v374, %v282
        %v383 = vmul.f32 %v375, %v282
        %v384 = vmul.f32 %v376, %v282
        %v385 = vmul.f32 %v377, %v282
        %v386 = vmul.f32 %v378, %v282
        %v387 = vmul.f32 %v379, %v282
        %v388 = vmul.f32 %v380, %v282
        %v389 = vpack.c.bf16 %v382, %v381
        %v390 = vpack.c.bf16 %v384, %v383
        %v391 = vpack.c.bf16 %v386, %v385
        %v392 = vpack.c.bf16 %v388, %v387
        %393 = vst.msk [vmem:[#allocation2] sm:$0xff] %vm292, %v389
        %394 = vst.msk [vmem:[#allocation2 + $0x8] sm:$0xff] %vm292, %v390
        %395 = vst.msk [vmem:[#allocation2 + $0x10] sm:$0xff] %vm292, %v391
        %396 = vst.msk [vmem:[#allocation2 + $0x18] sm:$0xff] %vm292, %v392
      $region36: #{contextual_attention.3} parent=31 // pred_fallthru
        _
      %v397 = vld [vmem:[#allocation2] sm:$0xff]
      %v398 = vld [vmem:[#allocation2 + $0x8] sm:$0xff]
      %v399 = vld [vmem:[#allocation2 + $0x10] sm:$0xff]
      %v400 = vld [vmem:[#allocation2 + $0x18] sm:$0xff]
      %v401 = vld [vmem:[%s242] sm:$0xf]
      %v402 = vld [vmem:[%s242 + $0x4] sm:$0xf]
      %v403 = vld [vmem:[%s242 + $0x8] sm:$0xf]
      %v404 = vld [vmem:[%s242 + $0xc] sm:$0xf]
      %v405 = vld [vmem:[%s242 + $0x10] sm:$0xf]
      %v406 = vld [vmem:[%s242 + $0x14] sm:$0xf]
      %v407 = vld [vmem:[%s242 + $0x18] sm:$0xf]
      %v408 = vld [vmem:[%s242 + $0x1c] sm:$0xf]
      %v417 = vunpack.c.l.b16 %v401
      %v418 = vunpack.c.l.b16 %v402
      %v419 = vunpack.c.l.b16 %v403
      %v420 = vunpack.c.l.b16 %v404
      %v421 = vunpack.c.l.b16 %v405
      %v422 = vunpack.c.l.b16 %v406
      %v423 = vunpack.c.l.b16 %v407
      %v424 = vunpack.c.l.b16 %v408
      %v425 = vpack.c.b16 %v418, %v417
      %v426 = vpack.c.b16 %v420, %v419
      %v427 = vpack.c.b16 %v422, %v421
      %v428 = vpack.c.b16 %v424, %v423
      %vm433 = vcmask 523264
      %v435 = vsel %vm433, %v397, 0
      %v438 = vsel %vm433, %v398, 0
      %v441 = vsel %vm433, %v399, 0
      %v444 = vsel %vm433, %v400, 0
      %446 = vmatprep.subr.bf16.mxu0 0
      %447 = vmatpush1.bf16.msra.mxu0 %v425
      %448 = vmatprep.subr.bf16.mxu0 0
      %449 = vmatpush1.bf16.msra.mxu0 %v426
      %450 = vmatprep.subr.bf16.mxu0 0
      %451 = vmatpush1.bf16.msra.mxu0 %v427
      %452 = vmatprep.subr.bf16.mxu0 0
      %453 = vmatpush1.bf16.msra.mxu0 %v428
      %454 = vmatprep.subr.bf16.mxu0 0
      %455 = vmatpush1.bf16.msra.mxu0 0
      %456 = vmatprep.subr.bf16.mxu0 0
      %457 = vmatpush1.bf16.msra.mxu0 0
      %458 = vmatprep.subr.bf16.mxu0 0
      %459 = vmatpush1.bf16.msra.mxu0 0
      %460 = vmatprep.subr.bf16.mxu0 0
      %461 = vmatpush1.bf16.msra.mxu0 0
      %462 = vmatprep.subr.bf16.mxu0 0
      %463 = vmatpush1.bf16.msra.mxu0 0
      %464 = vmatprep.subr.bf16.mxu0 0
      %465 = vmatpush1.bf16.msra.mxu0 0
      %466 = vmatprep.subr.bf16.mxu0 0
      %467 = vmatpush1.bf16.msra.mxu0 0
      %468 = vmatprep.subr.bf16.mxu0 0
      %469 = vmatpush1.bf16.msra.mxu0 0
      %470 = vmatprep.subr.bf16.mxu0 0
      %471 = vmatpush1.bf16.msra.mxu0 0
      %472 = vmatprep.subr.bf16.mxu0 0
      %473 = vmatpush1.bf16.msra.mxu0 0
      %474 = vmatprep.subr.bf16.mxu0 0
      %475 = vmatpush1.bf16.msra.mxu0 0
      %476 = vmatprep.subr.bf16.mxu0 0
      %477 = vmatpush1.bf16.msra.mxu0 0
      %478 = vmatprep.mubr.bf16.mxu0 0
      %479 = vmatmul.mubr.bf16.gmra.mrb[0].mxu0 %v435
      %v480 = vpop.f32.mrb[0].mxu0
      %v481 = vadd.f32 0.0, %v480
      %v482 = vpop.f32.mrb[0].mxu0
      %v483 = vpop.f32.mrb[0].mxu0
      %v484 = vadd.f32 0.0, %v483
      %v485 = vpop.f32.mrb[0].mxu0
      %486 = vmatprep.mubr.bf16.mxu0 0
      %487 = vmatmul.mubr.bf16.gmra.mrb[0].mxu0 %v438
      %v488 = vpop.f32.mrb[0].mxu0
      %v489 = vadd.f32 0.0, %v488
      %v490 = vpop.f32.mrb[0].mxu0
      %v491 = vpop.f32.mrb[0].mxu0
      %v492 = vadd.f32 0.0, %v491
      %v493 = vpop.f32.mrb[0].mxu0
      %494 = vmatprep.mubr.bf16.mxu0 0
      %495 = vmatmul.mubr.bf16.gmra.mrb[0].mxu0 %v441
      %v496 = vpop.f32.mrb[0].mxu0
      %v497 = vadd.f32 0.0, %v496
      %v498 = vpop.f32.mrb[0].mxu0
      %v499 = vpop.f32.mrb[0].mxu0
      %v500 = vadd.f32 0.0, %v499
      %v501 = vpop.f32.mrb[0].mxu0
      %502 = vmatprep.mubr.bf16.mxu0 0
      %503 = vmatmul.mubr.bf16.gmra.mrb[0].mxu0 %v444
      %v504 = vpop.f32.mrb[0].mxu0
      %v505 = vadd.f32 0.0, %v504
      %v506 = vpop.f32.mrb[0].mxu0
      %v507 = vpop.f32.mrb[0].mxu0
      %v508 = vadd.f32 0.0, %v507
      %v509 = vpop.f32.mrb[0].mxu0
      %510 = vdwg.mxu0
      %v511 = vpack.c.bf16 %v484, %v481
      %v512 = vpack.c.bf16 %v492, %v489
      %v513 = vpack.c.bf16 %v500, %v497
      %v514 = vpack.c.bf16 %v508, %v505
      %v519 = vunpack.c.l.b16 %v511
      %v520 = vunpack.c.h.b16 %v511
      %v521 = vunpack.c.l.b16 %v512
      %v522 = vunpack.c.h.b16 %v512
      %v523 = vunpack.c.l.b16 %v513
      %v524 = vunpack.c.h.b16 %v513
      %v525 = vunpack.c.l.b16 %v514
      %v526 = vunpack.c.h.b16 %v514
      %v527 = vpack.c.b16 %v519, %v519
      %v528 = vpack.c.b16 %v520, %v520
      %v529 = vpack.c.b16 %v521, %v521
      %v530 = vpack.c.b16 %v522, %v522
      %v531 = vpack.c.b16 %v523, %v523
      %v532 = vpack.c.b16 %v524, %v524
      %v533 = vpack.c.b16 %v525, %v525
      %v534 = vpack.c.b16 %v526, %v526
      %vm543 = vcmask 519168
      %544 = vst.msk [vmem:[%s254] sm:$0xf] %vm543, %v527
      %545 = vst.msk [vmem:[%s254 + $0x4] sm:$0xf] %vm543, %v528
      %546 = vst.msk [vmem:[%s254 + $0x8] sm:$0xf] %vm543, %v529
      %547 = vst.msk [vmem:[%s254 + $0xc] sm:$0xf] %vm543, %v530
      %548 = vst.msk [vmem:[%s254 + $0x10] sm:$0xf] %vm543, %v531
      %549 = vst.msk [vmem:[%s254 + $0x14] sm:$0xf] %vm543, %v532
      %550 = vst.msk [vmem:[%s254 + $0x18] sm:$0xf] %vm543, %v533
      %551 = vst.msk [vmem:[%s254 + $0x1c] sm:$0xf] %vm543, %v534
      %s552 = smul.u32 8, %s20
      %p553 = scmp.lt.s32.totalorder %s19, 1
      %s554 = scalar_select %p553, %s19, 1
      %p555 = scmp.lt.s32.totalorder %s552, 7
      %s556 = scalar_select %p555, %s552, 7
      %p557 = scmp.lt.s32.totalorder %s21, 0
      %s558 = scalar_select %p557, %s21, 0
      %s559 = sadd.s32 %s558, %s556
      %s560 = smul.addr %s554, 8
      %s561 = sadd.s32 %s559, %s560
      %s562 = smul.addr %s561, 4
      %s563 = scalar_lea.vmem %s3, %s562
      // Predicated region
      $region37: #{contextual_attention.3} parent=31 // pred_check
        %p564 = pneg %p132
      $region38: #{contextual_attention.3} parent=31 // pred_check_branch
        %566 = sbr.rel (%p564) target = $region40
      $region39: #{contextual_attention.3} parent=31 // pred_region
        %s567 = smul.u32 8, %s20
      $region40: #{contextual_attention.3} parent=31 // pred_fallthru
        _
    $region32: #{contextual_attention.3} parent=5 // pred_fallthru
      _
    %p568 = scmp.le.s32.totalorder 2, %s9
    // Predicated region
    $region41: #{contextual_attention.3} parent=5 // pred_check
      %p569 = pneg %p568
    $region42: #{contextual_attention.3} parent=5 // pred_check_branch
      %571 = sbr.rel (%p569) target = $region44
    $region43: #{contextual_attention.3} parent=5 // pred_region
      %s572 = ssub.s32 %s9, 2
      // Predicated region
      $region45: #{contextual_attention.3} parent=43 // pred_check
        %p573 = pneg %p138
      $region46: #{contextual_attention.3} parent=43 // pred_check_branch
        %575 = sbr.rel (%p573) target = $region48
      $region47: #{contextual_attention.3} parent=43 // pred_region
        %s576 = smul.u32 8, %s23
        %p577 = scmp.lt.s32.totalorder %s22, 1
        %s578 = scalar_select %p577, %s22, 1
        %p579 = scmp.lt.s32.totalorder %s576, 7
        %s580 = scalar_select %p579, %s576, 7
        %p581 = scmp.lt.s32.totalorder %s24, 0
        %s582 = scalar_select %p581, %s24, 0
        %s583 = sadd.s32 %s582, %s580
        %s584 = smul.addr %s578, 8
        %s585 = sadd.s32 %s583, %s584
        %s586 = smul.addr %s585, 4
        %s587 = scalar_lea.vmem %s3, %s586
      $region48: #{contextual_attention.3} parent=43 // pred_fallthru
        _
    $region44: #{contextual_attention.3} parent=5 // pred_fallthru
      _
  $region6: #{contextual_attention.3} parent=0 // loop_footer
    %s13 = sadd.s32 1, %s9
  $region7: #{contextual_attention.3} parent=0 // loop_footer_branch
    %8 = sbr.rel target = $region3
  $region8: #{contextual_attention.3} parent=0 // loop_exit
    _

</llo_original>
